<compile_context>
chip_gen: v6e
topology: v6e:2x2x1
jax: 0.10.0
libtpu: 0.0.40
codegen_flags: <defaults>
</compile_context>

<pallas_src>
import jax
import jax.numpy as jnp
from jax.experimental import pallas as pl
from jax.experimental.pallas import tpu as pltpu


def _round_up(x, m):
    return ((x + m - 1) // m) * m


def _make_kernel(num_classes, tile_rows, p_actual, covered_pixels):
    C, TR, P = num_classes, tile_rows, p_actual
    needs_mask = covered_pixels != P

    def kernel(x_ref, t_ref, o_ref):
        # x_ref: (N, C, TR, 128)  logits (caller dtype, upcast to f32 inside)
        # t_ref: (N, TR, 128)     integer labels (any integer dtype)
        # o_ref: (N, 1+3C, 128)   f32 per-lane partial sums for this row-block:
        #   [:, 0]            ce
        #   [:, 1    : 1+C]   per-class intersection  sum(floor(prob_c)*onehot_c)
        #   [:, 1+C  : 1+2C]  per-class trunc-prob    sum(floor(prob_c))
        #   [:, 1+2C : 1+3C]  per-class one-hot count sum(onehot_c)
        t = t_ref[...]

        if needs_mask:
            row = jax.lax.broadcasted_iota(jnp.int32, (TR, 128), 0)
            lane = jax.lax.broadcasted_iota(jnp.int32, (TR, 128), 1)
            gidx = (pl.program_id(0) * TR + row) * 128 + lane
            valid = (gidx < P)[None]               # (1, TR, 128) bool
            validf = valid.astype(jnp.float32)
        else:
            valid = None
            validf = None

        # Per-class ref-level slices: class sits on an outer axis, so each
        # slice is a dense (N, TR, 128) tile.  Sanitize padded / out-of-bounds
        # rows so exp/log stay finite (those pixels are masked out of all sums).
        xs = []
        for c in range(C):
            xc = x_ref[:, c].astype(jnp.float32)
            if valid is not None:
                xc = jnp.where(valid, xc, 0.0)
            xs.append(xc)

        m = xs[0]
        for c in range(1, C):
            m = jnp.maximum(m, xs[c])
        es = [jnp.exp(xs[c] - m) for c in range(C)]
        sez = es[0]
        for c in range(1, C):
            sez = sez + es[c]
        lse = m + jnp.log(sez)                      # per-pixel logsumexp

        # cross-entropy: lse - x[target]   (class select, no per-class products)
        x_t = xs[C - 1]
        for c in range(C - 2, -1, -1):
            x_t = jnp.where(t == c, xs[c], x_t)
        ce_pix = lse - x_t
        if validf is not None:
            ce_pix = ce_pix * validf

        parts = [jnp.sum(ce_pix, axis=1, keepdims=True)]          # (N, 1, 128)
        inter, trunc, cnt = [], [], []
        for c in range(C):
            ohb = t == c
            if valid is not None:
                ohb = jnp.logical_and(ohb, valid)
            ohf = ohb.astype(jnp.float32)
            # torch .long() truncation of softmax prob; true divide matches
            # the reference's divide-then-floor exactly.
            tp = jnp.floor(es[c] / sez)
            if validf is not None:
                tp = tp * validf
            inter.append(jnp.sum(tp * ohf, axis=1, keepdims=True))
            trunc.append(jnp.sum(tp, axis=1, keepdims=True))
            cnt.append(jnp.sum(ohf, axis=1, keepdims=True))

        # assemble in registers; one lane-dense (N, 1+3C, 128) store per block
        o_ref[...] = jnp.concatenate(parts + inter + trunc + cnt, axis=1)

    return kernel


def dice_ce_loss(predicted, target, num_classes=3, tile_p=16384):
    """predicted: (N, C, H, W) float logits (f32 or bf16); target: (N, H, W) ints.

    tile_p: pixels per grid step (rows of 128 lanes).  16k is a safe default;
    on v6e (128 MiB VMEM) it can be swept up to 32k-64k.
    """
    N, C, H, W = predicted.shape
    assert C == num_classes
    P = H * W
    WOUT = 1 + 3 * C

    x = predicted.reshape(N, C, P)
    t = target
    if not jnp.issubdtype(t.dtype, jnp.integer):
        t = t.astype(jnp.int32)          # torch .long(): truncate toward zero
    t = t.reshape(N, P)

    # Pixel axis laid out as (rows, 128): free reshape when P % 128 == 0;
    # otherwise a small zero pad to the next multiple of 128 (masked in-kernel).
    P128 = _round_up(P, 128)
    if P128 != P:
        x = jnp.pad(x, ((0, 0), (0, 0), (0, P128 - P)))
        t = jnp.pad(t, ((0, 0), (0, P128 - P)))
    R = P128 // 128
    x = x.reshape(N, C, R, 128)
    t = t.reshape(N, R, 128)

    # Rows per grid step: multiple of 8 (sublane) unless it equals the full row
    # axis; keep >= 2 blocks when possible so v7x's two TensorCores can split
    # the "parallel" grid axis.  Partial last blocks are masked in-kernel.
    TR_req = max(8, (int(tile_p) // 128 // 8) * 8)
    if R > TR_req:
        TR = TR_req
    elif R >= 16:
        TR = _round_up((R + 1) // 2, 8)
    else:
        TR = R
    nblk = -(-R // TR)
    covered = nblk * TR * 128

    # Scoped VMEM from real usage: double-buffered tiles + f32 temporaries.
    x_tile = N * C * TR * 128 * x.dtype.itemsize
    t_tile = N * TR * 128 * t.dtype.itemsize
    o_tile = N * WOUT * 128 * 4
    need = 2 * (x_tile + t_tile + o_tile) + 16 * N * TR * 128 * 4 + (4 << 20)
    vmem_limit = int(min(48 << 20, max(16 << 20, need)))

    stats = pl.pallas_call(
        _make_kernel(C, TR, P, covered),
        out_shape=jax.ShapeDtypeStruct((nblk, N, WOUT, 128), jnp.float32),
        grid_spec=pltpu.PrefetchScalarGridSpec(
            num_scalar_prefetch=0,
            grid=(nblk,),
            in_specs=[
                pl.BlockSpec((N, C, TR, 128), lambda i: (0, 0, i, 0)),
                pl.BlockSpec((N, TR, 128), lambda i: (0, i, 0)),
            ],
            out_specs=pl.BlockSpec((None, N, WOUT, 128), lambda i: (i, 0, 0, 0)),
        ),
        compiler_params=pltpu.CompilerParams(
            dimension_semantics=("parallel",),
            vmem_limit_bytes=vmem_limit,
        ),
    )(x, t)

    # tiny final combine: (nblk, N, 1+3C, 128) -> (N, 1+3C)
    tot = jnp.sum(stats, axis=(0, 3))
    ce = jnp.sum(tot[:, 0]) / jnp.float32(N * P)
    inter = tot[:, 1:1 + C]
    trunc = tot[:, 1 + C:1 + 2 * C]
    cnt = tot[:, 1 + 2 * C:1 + 3 * C]
    coef = (2.0 * inter + 1.0) / (trunc + cnt + 1.0)
    return ce + 1.0 - jnp.mean(coef)


def _reference(predicted, target, num_classes=3):
    # pure-JAX reference reproducing the PyTorch module exactly
    N, C, H, W = predicted.shape
    x = predicted.astype(jnp.float32).reshape(N, C, H * W)
    t = target.astype(jnp.int32).reshape(N, H * W)
    logp = jax.nn.log_softmax(x, axis=1)
    prob = jax.nn.softmax(x, axis=1)
    tprob = jnp.floor(prob)                       # tensor.long() truncation
    oh = jax.nn.one_hot(t, C, axis=1, dtype=jnp.float32)   # (N, C, P)
    ce = jnp.mean(jnp.sum(-logp * oh, axis=1))
    inter = jnp.sum(tprob * oh, axis=2)
    union = jnp.sum(tprob, axis=2) + jnp.sum(oh, axis=2)
    coef = (2.0 * inter + 1.0) / (union + 1.0)
    return ce + 1.0 - jnp.mean(coef)


if __name__ == "__main__":
    key = jax.random.PRNGKey(0)
    k1, k2, k3, k4 = jax.random.split(key, 4)

    # main case: num_classes = 3 (module default), lane-aligned spatial size
    B, C, H, W = 2, 3, 16, 16
    predicted = jax.random.normal(k1, (B, C, H, W), dtype=jnp.float32)
    target = jax.random.randint(k2, (B, H, W), 0, C, dtype=jnp.int32)

    loss = jax.block_until_ready(dice_ce_loss(predicted, target, num_classes=C))
    ref = jax.block_until_ready(_reference(predicted, target, num_classes=C))
    assert jnp.allclose(loss, ref, rtol=1e-4, atol=1e-4), (loss, ref)

    # ragged case: H*W not a multiple of 128 exercises the pad + in-kernel mask path
    H2, W2 = 10, 10
    predicted2 = jax.random.normal(k3, (B, C, H2, W2), dtype=jnp.float32)
    target2 = jax.random.randint(k4, (B, H2, W2), 0, C, dtype=jnp.int32)

    loss2 = jax.block_until_ready(dice_ce_loss(predicted2, target2, num_classes=C))
    ref2 = jax.block_until_ready(_reference(predicted2, target2, num_classes=C))
    assert jnp.allclose(loss2, ref2, rtol=1e-4, atol=1e-4), (loss2, ref2)

    print("KERNEL_OK")
</pallas_src>

<mosaic_0001>
module attributes {stable_mosaic.version = 11 : i64} {
  func.func @kernel(%arg0: i32, %arg1: memref<2x3x2x128xf32, #tpu.memory_space<vmem>>, %arg2: memref<2x2x128xi32, #tpu.memory_space<vmem>>, %arg3: memref<1x2x10x128xf32, #tpu.memory_space<vmem>>) attributes {dimension_semantics = [#tpu.dimension_semantics<parallel>], iteration_bounds = array<i64: 1>, scalar_prefetch = 0 : i64, scratch_operands = 0 : i64, tpu.core_type = #tpu.core_type<tc>, window_params = [{transform_indices = @transform_0, window_bounds = array<i64: 2, 3, 2, 128>}, {transform_indices = @transform_1, window_bounds = array<i64: 2, 2, 128>}, {transform_indices = @transform_2, window_bounds = array<i64: 1, 2, 10, 128>}]} {
    %c0 = arith.constant 0 : index
    %c0_0 = arith.constant 0 : index
    %c0_1 = arith.constant 0 : index
    %0 = vector.load %arg2[%c0, %c0_0, %c0_1] : memref<2x2x128xi32, #tpu.memory_space<vmem>>, vector<2x2x128xi32>
    %c0_2 = arith.constant 0 : index
    %c0_3 = arith.constant 0 : index
    %c0_4 = arith.constant 0 : index
    %c0_5 = arith.constant 0 : index
    %1 = vector.load %arg1[%c0_2, %c0_3, %c0_4, %c0_5] : memref<2x3x2x128xf32, #tpu.memory_space<vmem>>, vector<2x1x2x128xf32>
    %2 = vector.shape_cast %1 : vector<2x1x2x128xf32> to vector<2x2x128xf32>
    %c0_6 = arith.constant 0 : index
    %c1 = arith.constant 1 : index
    %c0_7 = arith.constant 0 : index
    %c0_8 = arith.constant 0 : index
    %3 = vector.load %arg1[%c0_6, %c1, %c0_7, %c0_8] : memref<2x3x2x128xf32, #tpu.memory_space<vmem>>, vector<2x1x2x128xf32>
    %4 = vector.shape_cast %3 : vector<2x1x2x128xf32> to vector<2x2x128xf32>
    %c0_9 = arith.constant 0 : index
    %c2 = arith.constant 2 : index
    %c0_10 = arith.constant 0 : index
    %c0_11 = arith.constant 0 : index
    %5 = vector.load %arg1[%c0_9, %c2, %c0_10, %c0_11] : memref<2x3x2x128xf32, #tpu.memory_space<vmem>>, vector<2x1x2x128xf32>
    %6 = vector.shape_cast %5 : vector<2x1x2x128xf32> to vector<2x2x128xf32>
    %7 = arith.maximumf %2, %4 : vector<2x2x128xf32>
    %8 = arith.maximumf %7, %6 : vector<2x2x128xf32>
    %9 = arith.subf %2, %8 : vector<2x2x128xf32>
    %10 = math.exp %9 : vector<2x2x128xf32>
    %11 = arith.subf %4, %8 : vector<2x2x128xf32>
    %12 = math.exp %11 : vector<2x2x128xf32>
    %13 = arith.subf %6, %8 : vector<2x2x128xf32>
    %14 = math.exp %13 : vector<2x2x128xf32>
    %15 = arith.addf %10, %12 : vector<2x2x128xf32>
    %16 = arith.addf %15, %14 : vector<2x2x128xf32>
    %17 = math.log %16 : vector<2x2x128xf32>
    %18 = arith.addf %8, %17 : vector<2x2x128xf32>
    %c1_i32 = arith.constant 1 : i32
    %19 = vector.broadcast %c1_i32 : i32 to vector<2x2x128xi32>
    %20 = arith.cmpi eq, %0, %19 : vector<2x2x128xi32>
    %21 = arith.select %20, %4, %6 : vector<2x2x128xi1>, vector<2x2x128xf32>
    %c0_i32 = arith.constant 0 : i32
    %22 = vector.broadcast %c0_i32 : i32 to vector<2x2x128xi32>
    %23 = arith.cmpi eq, %0, %22 : vector<2x2x128xi32>
    %24 = arith.select %23, %2, %21 : vector<2x2x128xi1>, vector<2x2x128xf32>
    %25 = arith.subf %18, %24 : vector<2x2x128xf32>
    %cst = arith.constant dense<0.000000e+00> : vector<2x128xf32>
    %26 = vector.multi_reduction <add>, %25, %cst [1] : vector<2x2x128xf32> to vector<2x128xf32>
    %27 = vector.shape_cast %26 : vector<2x128xf32> to vector<2x1x128xf32>
    %c0_i32_12 = arith.constant 0 : i32
    %28 = vector.broadcast %c0_i32_12 : i32 to vector<2x2x128xi32>
    %29 = arith.cmpi eq, %0, %28 : vector<2x2x128xi32>
    %30 = arith.extui %29 : vector<2x2x128xi1> to vector<2x2x128xi32>
    %31 = arith.sitofp %30 : vector<2x2x128xi32> to vector<2x2x128xf32>
    %32 = arith.divf %10, %16 : vector<2x2x128xf32>
    %33 = math.floor %32 : vector<2x2x128xf32>
    %34 = arith.mulf %33, %31 : vector<2x2x128xf32>
    %cst_13 = arith.constant dense<0.000000e+00> : vector<2x128xf32>
    %35 = vector.multi_reduction <add>, %34, %cst_13 [1] : vector<2x2x128xf32> to vector<2x128xf32>
    %36 = vector.shape_cast %35 : vector<2x128xf32> to vector<2x1x128xf32>
    %cst_14 = arith.constant dense<0.000000e+00> : vector<2x128xf32>
    %37 = vector.multi_reduction <add>, %33, %cst_14 [1] : vector<2x2x128xf32> to vector<2x128xf32>
    %38 = vector.shape_cast %37 : vector<2x128xf32> to vector<2x1x128xf32>
    %cst_15 = arith.constant dense<0.000000e+00> : vector<2x128xf32>
    %39 = vector.multi_reduction <add>, %31, %cst_15 [1] : vector<2x2x128xf32> to vector<2x128xf32>
    %40 = vector.shape_cast %39 : vector<2x128xf32> to vector<2x1x128xf32>
    %c1_i32_16 = arith.constant 1 : i32
    %41 = vector.broadcast %c1_i32_16 : i32 to vector<2x2x128xi32>
    %42 = arith.cmpi eq, %0, %41 : vector<2x2x128xi32>
    %43 = arith.extui %42 : vector<2x2x128xi1> to vector<2x2x128xi32>
    %44 = arith.sitofp %43 : vector<2x2x128xi32> to vector<2x2x128xf32>
    %45 = arith.divf %12, %16 : vector<2x2x128xf32>
    %46 = math.floor %45 : vector<2x2x128xf32>
    %47 = arith.mulf %46, %44 : vector<2x2x128xf32>
    %cst_17 = arith.constant dense<0.000000e+00> : vector<2x128xf32>
    %48 = vector.multi_reduction <add>, %47, %cst_17 [1] : vector<2x2x128xf32> to vector<2x128xf32>
    %49 = vector.shape_cast %48 : vector<2x128xf32> to vector<2x1x128xf32>
    %cst_18 = arith.constant dense<0.000000e+00> : vector<2x128xf32>
    %50 = vector.multi_reduction <add>, %46, %cst_18 [1] : vector<2x2x128xf32> to vector<2x128xf32>
    %51 = vector.shape_cast %50 : vector<2x128xf32> to vector<2x1x128xf32>
    %cst_19 = arith.constant dense<0.000000e+00> : vector<2x128xf32>
    %52 = vector.multi_reduction <add>, %44, %cst_19 [1] : vector<2x2x128xf32> to vector<2x128xf32>
    %53 = vector.shape_cast %52 : vector<2x128xf32> to vector<2x1x128xf32>
    %c2_i32 = arith.constant 2 : i32
    %54 = vector.broadcast %c2_i32 : i32 to vector<2x2x128xi32>
    %55 = arith.cmpi eq, %0, %54 : vector<2x2x128xi32>
    %56 = arith.extui %55 : vector<2x2x128xi1> to vector<2x2x128xi32>
    %57 = arith.sitofp %56 : vector<2x2x128xi32> to vector<2x2x128xf32>
    %58 = arith.divf %14, %16 : vector<2x2x128xf32>
    %59 = math.floor %58 : vector<2x2x128xf32>
    %60 = arith.mulf %59, %57 : vector<2x2x128xf32>
    %cst_20 = arith.constant dense<0.000000e+00> : vector<2x128xf32>
    %61 = vector.multi_reduction <add>, %60, %cst_20 [1] : vector<2x2x128xf32> to vector<2x128xf32>
    %62 = vector.shape_cast %61 : vector<2x128xf32> to vector<2x1x128xf32>
    %cst_21 = arith.constant dense<0.000000e+00> : vector<2x128xf32>
    %63 = vector.multi_reduction <add>, %59, %cst_21 [1] : vector<2x2x128xf32> to vector<2x128xf32>
    %64 = vector.shape_cast %63 : vector<2x128xf32> to vector<2x1x128xf32>
    %cst_22 = arith.constant dense<0.000000e+00> : vector<2x128xf32>
    %65 = vector.multi_reduction <add>, %57, %cst_22 [1] : vector<2x2x128xf32> to vector<2x128xf32>
    %66 = vector.shape_cast %65 : vector<2x128xf32> to vector<2x1x128xf32>
    %67 = tpu.concatenate %27, %36, %49, %62, %38, %51, %64, %40, %53, %66 in 1 : vector<2x1x128xf32>, vector<2x1x128xf32>, vector<2x1x128xf32>, vector<2x1x128xf32>, vector<2x1x128xf32>, vector<2x1x128xf32>, vector<2x1x128xf32>, vector<2x1x128xf32>, vector<2x1x128xf32>, vector<2x1x128xf32> -> vector<2x10x128xf32>
    %c0_23 = arith.constant 0 : index
    %c0_24 = arith.constant 0 : index
    %c0_25 = arith.constant 0 : index
    %c0_26 = arith.constant 0 : index
    %68 = vector.load %arg3[%c0_23, %c0_24, %c0_25, %c0_26] : memref<1x2x10x128xf32, #tpu.memory_space<vmem>>, vector<1x2x10x128xf32>
    %69 = vector.shape_cast %68 : vector<1x2x10x128xf32> to vector<2x10x128xf32>
    %70 = vector.shape_cast %67 : vector<2x10x128xf32> to vector<1x2x10x128xf32>
    tpu.vector_store %arg3[%c0_23, %c0_24, %c0_25, %c0_26], %70 {strides = array<i32>} : memref<1x2x10x128xf32, #tpu.memory_space<vmem>>, vector<1x2x10x128xf32>,
    return
  }
  func.func @transform_0(%arg0: i32) -> (i32, i32, i32, i32) {
    %c0_i32 = arith.constant 0 : i32
    %c0_i32_0 = arith.constant 0 : i32
    %c0_i32_1 = arith.constant 0 : i32
    %c0_i32_2 = arith.constant 0 : i32
    return %c0_i32, %c0_i32_0, %arg0, %c0_i32_1 : i32, i32, i32, i32
  }
  func.func @transform_1(%arg0: i32) -> (i32, i32, i32) {
    %c0_i32 = arith.constant 0 : i32
    %c0_i32_0 = arith.constant 0 : i32
    %c0_i32_1 = arith.constant 0 : i32
    return %c0_i32, %arg0, %c0_i32_0 : i32, i32, i32
  }
  func.func @transform_2(%arg0: i32) -> (i32, i32, i32, i32) {
    %c0_i32 = arith.constant 0 : i32
    %c0_i32_0 = arith.constant 0 : i32
    %c0_i32_1 = arith.constant 0 : i32
    %c0_i32_2 = arith.constant 0 : i32
    return %arg0, %c0_i32, %c0_i32_0, %c0_i32_1 : i32, i32, i32, i32
  }
}

</mosaic_0001>

<llo_original>
// kernel: tpu_custom_call.1
$region0: #{tpu_custom_call.1}
  #allocation0 [shape = 'u32[]', space=smem, size = 0x4, offset = 0x4, fixed_abs, tag = 'smem constant byte address 0x4 - core index']
  #allocation1 [shape = 'u32[144,128]{1,0:T(1,128)}', space=vmem, size = 0x12000, scoped, tag = 'internal scratch']
  %s0 = inlined_call_operand.hbm [shape: f32[2,3,2,128], index: 0, kind: input, shape index: {}]
  %s1 = inlined_call_operand.hbm [shape: s32[2,2,128], index: 1, kind: input, shape index: {}]
  %s2 = inlined_call_operand.vmem [shape: f32[1,2,10,128], index: 2, kind: output, shape index: {}]
  %s3 = sld [smem:[#allocation0]]
  $region26: #{tpu_custom_call.1} parent=0
    _
  %s5 = ssub.s32 1, %s3
  %s6 = scalar_select 0, %s5, %s3
  $region1: #{tpu_custom_call.1} parent=0
    #allocation2 [shape = 'u8[6144]{0}', space=vmem, size = 0x1800, scoped, tag = 'input window, operand 0, single buffered']
    #allocation3 [shape = 's32[1]{0}', space=sflag, size = 0x4, scoped, tag = 'scoped memory for tpu_custom_call.1']
    #allocation4 [shape = 'u8[2048]{0}', space=vmem, size = 0x800, scoped, tag = 'input window, operand 1, single buffered']
    #allocation5 [shape = 's32[1]{0}', space=sflag, size = 0x4, scoped, tag = 'scoped memory for tpu_custom_call.1']
    %7 = vsyncpa [#allocation3], 0
    %8 = vsyncpa [#allocation5], 0
    // Predicated region
    $region2: #{tpu_custom_call.1} parent=1 // pred_check
      _
    $region3: #{tpu_custom_call.1} parent=1 // pred_check_branch
      %10 = sbr.rel (0) target = $region5
    $region4: #{tpu_custom_call.1} parent=1 // pred_region
      %s12 = ssub.s32 192, 192
      %13 = vsyncadd [#allocation3], %s12
      %s14 = sshll.u32 [#allocation2], 4
      %s15 = int_to_ptr.vmem [resolvable:$true] %s14
      %20 = dma.hbm_to_vmem [thread:$0]  %s0, 192, %s15, [#allocation3], 32, 32, 2
    $region5: #{tpu_custom_call.1} parent=1 // pred_fallthru
      _
    // Predicated region
    $region6: #{tpu_custom_call.1} parent=1 // pred_check
      _
    $region7: #{tpu_custom_call.1} parent=1 // pred_check_branch
      %22 = sbr.rel (0) target = $region9
    $region8: #{tpu_custom_call.1} parent=1 // pred_region
      %s24 = ssub.s32 64, 64
      %25 = vsyncadd [#allocation5], %s24
      %s26 = sshll.u32 [#allocation4], 4
      %s27 = int_to_ptr.vmem [resolvable:$true] %s26
      %32 = dma.hbm_to_vmem [thread:$0]  %s1, 64, %s27, [#allocation5], 32, 32, 2
    $region9: #{tpu_custom_call.1} parent=1 // pred_fallthru
      _
    // Predicated region
    $region10: #{tpu_custom_call.1} parent=1 // pred_check
      _
    $region11: #{tpu_custom_call.1} parent=1 // pred_check_branch
      %34 = sbr.rel (0) target = $region13
    $region12: #{tpu_custom_call.1} parent=1 // pred_region
      %35 = dma.done [#allocation3], 192
    $region13: #{tpu_custom_call.1} parent=1 // pred_fallthru
      _
    // Predicated region
    $region14: #{tpu_custom_call.1} parent=1 // pred_check
      _
    $region15: #{tpu_custom_call.1} parent=1 // pred_check_branch
      %37 = sbr.rel (0) target = $region17
    $region16: #{tpu_custom_call.1} parent=1 // pred_region
      %38 = dma.done [#allocation5], 64
    $region17: #{tpu_custom_call.1} parent=1 // pred_fallthru
      _
    %v39 = vld [vmem:[#allocation4] sm:$0x3]
    %v40 = vld [vmem:[#allocation4 + $0x2] sm:$0x3]
    %v41 = vld [vmem:[#allocation2] sm:$0x3]
    %v42 = vld [vmem:[#allocation2 + $0x6] sm:$0x3]
    %s43 = scalar_lea.vmem [#allocation2], 2
    %v44 = vld [vmem:[%s43] sm:$0x3]
    %v45 = vld [vmem:[%s43 + $0x6] sm:$0x3]
    %s46 = scalar_lea.vmem [#allocation2], 4
    %v47 = vld [vmem:[%s46] sm:$0x3]
    %v48 = vld [vmem:[%s46 + $0x6] sm:$0x3]
    %v49 = vmax.f32 %v41, %v44
    %v50 = vmax.f32 %v42, %v45
    %v51 = vmax.f32 %v49, %v47
    %v52 = vmax.f32 %v50, %v48
    %v53 = vsub.f32 %v41, %v51
    %v54 = vsub.f32 %v42, %v52
    %v55 = vmul.f32 %v53, 1.442695
    %v56 = vpow.pop %v55
    %v57 = vmul.f32 %v54, 1.442695
    %v58 = vpow.pop %v57
    %v59 = vsub.f32 %v44, %v51
    %v60 = vsub.f32 %v45, %v52
    %v61 = vmul.f32 %v59, 1.442695
    %v62 = vpow.pop %v61
    %v63 = vmul.f32 %v60, 1.442695
    %v64 = vpow.pop %v63
    %v65 = vsub.f32 %v47, %v51
    %v66 = vsub.f32 %v48, %v52
    %v67 = vmul.f32 %v65, 1.442695
    %v68 = vpow.pop %v67
    %v69 = vmul.f32 %v66, 1.442695
    %v70 = vpow.pop %v69
    %v71 = vadd.f32 %v56, %v62
    %v72 = vadd.f32 %v58, %v64
    %v73 = vadd.f32 %v71, %v68
    %v74 = vadd.f32 %v72, %v70
    %v75 = vlog2.pop %v73
    %v76 = vmul.f32 %v75, 0.6931472
    %v77 = vlog2.pop %v74
    %v78 = vmul.f32 %v77, 0.6931472
    %v79 = vadd.f32 %v51, %v76
    %v80 = vadd.f32 %v52, %v78
    %vm81 = vcmp.eq.s32.totalorder %v39, 1
    %vm82 = vcmp.eq.s32.totalorder %v40, 1
    %v83 = vsel %vm81, %v44, %v47
    %v84 = vsel %vm82, %v45, %v48
    %vm85 = vcmp.eq.s32.totalorder %v39, 0
    %vm86 = vcmp.eq.s32.totalorder %v40, 0
    %v87 = vsel %vm85, %v41, %v83
    %v88 = vsel %vm86, %v42, %v84
    %v89 = vsub.f32 %v79, %v87
    %v90 = vsub.f32 %v80, %v88
    %vm91 = vcmask 1041408
    %v92 = vsel %vm91, %v89, 0.0
    %v93 = vrot.slane %v92, 4
    %v94 = vadd.f32 %v92, %v93
    %v95 = vrot.slane %v94, 2
    %v96 = vadd.f32 %v94, %v95
    %v97 = vrot.slane %v96, 1
    %v98 = vadd.f32 %v96, %v97
    %v99 = vsel %vm91, %v90, 0.0
    %v100 = vrot.slane %v99, 4
    %v101 = vadd.f32 %v99, %v100
    %v102 = vrot.slane %v101, 2
    %v103 = vadd.f32 %v101, %v102
    %v104 = vrot.slane %v103, 1
    %v105 = vadd.f32 %v103, %v104
    %v106 = vsel %vm85, 1, 0
    %v107 = vsel %vm86, 1, 0
    %v108 = vcvt.s32.f32 %v106
    %v109 = vcvt.s32.f32 %v107
    %v110 = vrcp.pop %v73
    %v111 = vmul.f32 %v56, %v110
    %v112 = vrcp.pop %v74
    %v113 = vmul.f32 %v58, %v112
    %v114 = vfloor.f32 %v111
    %v115 = vfloor.f32 %v113
    %v116 = vmul.f32 %v114, %v108
    %v117 = vmul.f32 %v115, %v109
    %v118 = vsel %vm91, %v116, 0.0
    %v119 = vrot.slane %v118, 4
    %v120 = vadd.f32 %v118, %v119
    %v121 = vrot.slane %v120, 2
    %v122 = vadd.f32 %v120, %v121
    %v123 = vrot.slane %v122, 1
    %v124 = vadd.f32 %v122, %v123
    %v125 = vsel %vm91, %v117, 0.0
    %v126 = vrot.slane %v125, 4
    %v127 = vadd.f32 %v125, %v126
    %v128 = vrot.slane %v127, 2
    %v129 = vadd.f32 %v127, %v128
    %v130 = vrot.slane %v129, 1
    %v131 = vadd.f32 %v129, %v130
    %v132 = vsel %vm91, %v114, 0.0
    %v133 = vrot.slane %v132, 4
    %v134 = vadd.f32 %v132, %v133
    %v135 = vrot.slane %v134, 2
    %v136 = vadd.f32 %v134, %v135
    %v137 = vrot.slane %v136, 1
    %v138 = vadd.f32 %v136, %v137
    %v139 = vsel %vm91, %v115, 0.0
    %v140 = vrot.slane %v139, 4
    %v141 = vadd.f32 %v139, %v140
    %v142 = vrot.slane %v141, 2
    %v143 = vadd.f32 %v141, %v142
    %v144 = vrot.slane %v143, 1
    %v145 = vadd.f32 %v143, %v144
    %v146 = vsel %vm91, %v108, 0.0
    %v147 = vrot.slane %v146, 4
    %v148 = vadd.f32 %v146, %v147
    %v149 = vrot.slane %v148, 2
    %v150 = vadd.f32 %v148, %v149
    %v151 = vrot.slane %v150, 1
    %v152 = vadd.f32 %v150, %v151
    %v153 = vsel %vm91, %v109, 0.0
    %v154 = vrot.slane %v153, 4
    %v155 = vadd.f32 %v153, %v154
    %v156 = vrot.slane %v155, 2
    %v157 = vadd.f32 %v155, %v156
    %v158 = vrot.slane %v157, 1
    %v159 = vadd.f32 %v157, %v158
    %v160 = vsel %vm81, 1, 0
    %v161 = vsel %vm82, 1, 0
    %v162 = vcvt.s32.f32 %v160
    %v163 = vcvt.s32.f32 %v161
    %v164 = vmul.f32 %v62, %v110
    %v165 = vmul.f32 %v64, %v112
    %v166 = vfloor.f32 %v164
    %v167 = vfloor.f32 %v165
    %v168 = vmul.f32 %v166, %v162
    %v169 = vmul.f32 %v167, %v163
    %v170 = vsel %vm91, %v168, 0.0
    %v171 = vrot.slane %v170, 4
    %v172 = vadd.f32 %v170, %v171
    %v173 = vrot.slane %v172, 2
    %v174 = vadd.f32 %v172, %v173
    %v175 = vrot.slane %v174, 1
    %v176 = vadd.f32 %v174, %v175
    %v177 = vsel %vm91, %v169, 0.0
    %v178 = vrot.slane %v177, 4
    %v179 = vadd.f32 %v177, %v178
    %v180 = vrot.slane %v179, 2
    %v181 = vadd.f32 %v179, %v180
    %v182 = vrot.slane %v181, 1
    %v183 = vadd.f32 %v181, %v182
    %v184 = vsel %vm91, %v166, 0.0
    %v185 = vrot.slane %v184, 4
    %v186 = vadd.f32 %v184, %v185
    %v187 = vrot.slane %v186, 2
    %v188 = vadd.f32 %v186, %v187
    %v189 = vrot.slane %v188, 1
    %v190 = vadd.f32 %v188, %v189
    %v191 = vsel %vm91, %v167, 0.0
    %v192 = vrot.slane %v191, 4
    %v193 = vadd.f32 %v191, %v192
    %v194 = vrot.slane %v193, 2
    %v195 = vadd.f32 %v193, %v194
    %v196 = vrot.slane %v195, 1
    %v197 = vadd.f32 %v195, %v196
    %v198 = vsel %vm91, %v162, 0.0
    %v199 = vrot.slane %v198, 4
    %v200 = vadd.f32 %v198, %v199
    %v201 = vrot.slane %v200, 2
    %v202 = vadd.f32 %v200, %v201
    %v203 = vrot.slane %v202, 1
    %v204 = vadd.f32 %v202, %v203
    %v205 = vsel %vm91, %v163, 0.0
    %v206 = vrot.slane %v205, 4
    %v207 = vadd.f32 %v205, %v206
    %v208 = vrot.slane %v207, 2
    %v209 = vadd.f32 %v207, %v208
    %v210 = vrot.slane %v209, 1
    %v211 = vadd.f32 %v209, %v210
    %vm212 = vcmp.eq.s32.totalorder %v39, 2
    %vm213 = vcmp.eq.s32.totalorder %v40, 2
    %v214 = vsel %vm212, 1, 0
    %v215 = vsel %vm213, 1, 0
    %v216 = vcvt.s32.f32 %v214
    %v217 = vcvt.s32.f32 %v215
    %v218 = vmul.f32 %v68, %v110
    %v219 = vmul.f32 %v70, %v112
    %v220 = vfloor.f32 %v218
    %v221 = vfloor.f32 %v219
    %v222 = vmul.f32 %v220, %v216
    %v223 = vmul.f32 %v221, %v217
    %v224 = vsel %vm91, %v222, 0.0
    %v225 = vrot.slane %v224, 4
    %v226 = vadd.f32 %v224, %v225
    %v227 = vrot.slane %v226, 2
    %v228 = vadd.f32 %v226, %v227
    %v229 = vrot.slane %v228, 1
    %v230 = vadd.f32 %v228, %v229
    %v231 = vsel %vm91, %v223, 0.0
    %v232 = vrot.slane %v231, 4
    %v233 = vadd.f32 %v231, %v232
    %v234 = vrot.slane %v233, 2
    %v235 = vadd.f32 %v233, %v234
    %v236 = vrot.slane %v235, 1
    %v237 = vadd.f32 %v235, %v236
    %v238 = vsel %vm91, %v220, 0.0
    %v239 = vrot.slane %v238, 4
    %v240 = vadd.f32 %v238, %v239
    %v241 = vrot.slane %v240, 2
    %v242 = vadd.f32 %v240, %v241
    %v243 = vrot.slane %v242, 1
    %v244 = vadd.f32 %v242, %v243
    %v245 = vsel %vm91, %v221, 0.0
    %v246 = vrot.slane %v245, 4
    %v247 = vadd.f32 %v245, %v246
    %v248 = vrot.slane %v247, 2
    %v249 = vadd.f32 %v247, %v248
    %v250 = vrot.slane %v249, 1
    %v251 = vadd.f32 %v249, %v250
    %v252 = vsel %vm91, %v216, 0.0
    %v253 = vrot.slane %v252, 4
    %v254 = vadd.f32 %v252, %v253
    %v255 = vrot.slane %v254, 2
    %v256 = vadd.f32 %v254, %v255
    %v257 = vrot.slane %v256, 1
    %v258 = vadd.f32 %v256, %v257
    %v259 = vsel %vm91, %v217, 0.0
    %v260 = vrot.slane %v259, 4
    %v261 = vadd.f32 %v259, %v260
    %v262 = vrot.slane %v261, 2
    %v263 = vadd.f32 %v261, %v262
    %v264 = vrot.slane %v263, 1
    %v265 = vadd.f32 %v263, %v264
    %vm266 = vcmask 1040384
    %v267 = vsel %vm266, %v98, %v124
    %v268 = vsel %vm266, %v105, %v131
    %v269 = vsel %vm91, %v267, %v176
    %v270 = vsel %vm91, %v268, %v183
    %vm271 = vcmask 1042432
    %v272 = vsel %vm271, %v269, %v230
    %v273 = vsel %vm271, %v270, %v237
    %vm274 = vcmask 1043456
    %v275 = vsel %vm274, %v272, %v138
    %v276 = vsel %vm274, %v273, %v145
    %vm277 = vcmask 1044480
    %v278 = vsel %vm277, %v275, %v190
    %v279 = vsel %vm277, %v276, %v197
    %vm280 = vcmask 1045504
    %v281 = vsel %vm280, %v278, %v244
    %v282 = vsel %vm280, %v279, %v251
    %vm283 = vcmask 1046528
    %v284 = vsel %vm283, %v281, %v152
    %v285 = vsel %vm283, %v282, %v159
    %v286 = vsel %vm266, %v204, %v258
    %v287 = vsel %vm266, %v211, %v265
    %288 = vst [vmem:[%s2] sm:$0xff] %v284
    %289 = vst [vmem:[%s2 + $0x8] sm:$0x3] %v286
    %290 = vst [vmem:[%s2 + $0x10] sm:$0xff] %v285
    %291 = vst [vmem:[%s2 + $0x18] sm:$0x3] %v287
    // Predicated region
    $region18: #{tpu_custom_call.1} parent=1 // pred_check
      _
    $region19: #{tpu_custom_call.1} parent=1 // pred_check_branch
      %293 = sbr.rel (0) target = $region21
    $region20: #{tpu_custom_call.1} parent=1 // pred_region
      _
    $region21: #{tpu_custom_call.1} parent=1 // pred_fallthru
      _
    // Predicated region
    $region22: #{tpu_custom_call.1} parent=1 // pred_check
      _
    $region23: #{tpu_custom_call.1} parent=1 // pred_check_branch
      %295 = sbr.rel (0) target = $region25
    $region24: #{tpu_custom_call.1} parent=1 // pred_region
      _
    $region25: #{tpu_custom_call.1} parent=1 // pred_fallthru
      _
    %296 = vsyncpa [#allocation3], 1
    %297 = vsyncpa [#allocation5], 1

</llo_original>
